<compile_context>
chip_gen: v5e
topology: v5e:2x2
jax: 0.10.0
libtpu: 0.0.40
codegen_flags: <defaults>
</compile_context>

<pallas_src>
import functools

import jax
import jax.numpy as jnp
from jax.experimental import pallas as pl
from jax.experimental.pallas import tpu as pltpu


_LANES = 128
# ~2 MiB blocks: large enough to sit near the HBM roofline (per-step overhead
# ~0.35us becomes negligible), small enough that in+out double-buffering
# (~8 MiB) fits every chip's default scoped VMEM without raising the limit.
_TARGET_BLOCK_BYTES = 2 * 1024 * 1024


def _general_relu_kernel(x_ref, o_ref, *, leak, sub, maxv):
    x = x_ref[...]
    if leak is not None:
        y = jnp.where(x >= 0, x, x * jnp.asarray(leak, x.dtype))
    else:
        y = jnp.maximum(x, jnp.zeros((), x.dtype))
    if sub is not None:
        y = y - jnp.asarray(sub, x.dtype)
    if maxv is not None:
        y = jnp.minimum(y, jnp.asarray(maxv, x.dtype))
    o_ref[...] = y


def _round_up(v, m):
    return ((v + m - 1) // m) * m


def general_relu(x, leak=None, sub=None, maxv=None, *, donate_input=False):
    """Elementwise GeneralRelu for any shape / dtype (memory-bound)."""
    orig_shape = x.shape
    dtype = x.dtype
    n = x.size
    itemsize = jnp.dtype(dtype).itemsize
    # Sublane packing: 8 for 4-byte, 16 for 2-byte, 32 for 1-byte dtypes.
    sublane = max(8, 32 // itemsize)

    # Lane-dense (rows, 128) slab. Only pad when flat length isn't already a
    # multiple of 128 (avoids an extra full HBM pad copy + slice copy).
    padded_n = _round_up(n, _LANES)
    rows = padded_n // _LANES
    if padded_n != n:
        x2d = jnp.pad(x.reshape(-1), (0, padded_n - n)).reshape(rows, _LANES)
    else:
        x2d = x.reshape(rows, _LANES)

    # Row-tile selection:
    #  - rows <= sublane: single full-extent block (allowed by the (8,128) rule).
    #  - else: ~2 MiB blocks, rounded to a sublane multiple, capped so the grid
    #    has >= 2 steps (both v7x TensorCores get work). Ragged last block is
    #    handled by Pallas via grid = cdiv(rows, tile_rows).
    if rows <= sublane:
        tile_rows = rows
    else:
        tile_rows = max(
            sublane,
            (_TARGET_BLOCK_BYTES // (_LANES * itemsize)) // sublane * sublane,
        )
        half = _round_up(pl.cdiv(rows, 2), sublane)
        tile_rows = min(tile_rows, half)
    grid = (pl.cdiv(rows, tile_rows),)

    kernel = functools.partial(_general_relu_kernel, leak=leak, sub=sub, maxv=maxv)
    extra_kwargs = {}
    if donate_input:
        # Activation applied "in place": reuse the input HBM buffer.
        extra_kwargs["input_output_aliases"] = {0: 0}

    out2d = pl.pallas_call(
        kernel,
        out_shape=jax.ShapeDtypeStruct((rows, _LANES), dtype),
        grid_spec=pltpu.PrefetchScalarGridSpec(
            num_scalar_prefetch=0,
            grid=grid,
            in_specs=[pl.BlockSpec((tile_rows, _LANES), lambda i: (i, 0))],
            out_specs=pl.BlockSpec((tile_rows, _LANES), lambda i: (i, 0)),
        ),
        compiler_params=pltpu.CompilerParams(
            dimension_semantics=("parallel",)),
        **extra_kwargs,
    )(x2d)

    if padded_n != n:
        return out2d.reshape(-1)[:n].reshape(orig_shape)
    return out2d.reshape(orig_shape)


def general_relu_ref(x, leak=None, sub=None, maxv=None):
    if leak is not None:
        y = jnp.where(x >= 0, x, x * jnp.asarray(leak, x.dtype))
    else:
        y = jnp.maximum(x, 0)
    if sub is not None:
        y = y - jnp.asarray(sub, x.dtype)
    if maxv is not None:
        y = jnp.minimum(y, jnp.asarray(maxv, x.dtype))
    return y


if __name__ == "__main__":
    key = jax.random.PRNGKey(0)
    # NCHW like the PyTorch module's typical conv-activation usage.
    x = jax.random.normal(key, (2, 4, 16, 16), dtype=jnp.float32) * 3.0

    # fastai-style arguments: leak=0.1, sub=0.4, maxv=6.0
    leak, sub, maxv = 0.1, 0.4, 6.0
    out = jax.block_until_ready(general_relu(x, leak=leak, sub=sub, maxv=maxv))
    ref = general_relu_ref(x, leak=leak, sub=sub, maxv=maxv)
    assert out.shape == x.shape and out.dtype == x.dtype
    assert jnp.allclose(out, ref, atol=1e-6, rtol=1e-6)

    # Default path (plain ReLU, no sub/maxv).
    out2 = jax.block_until_ready(general_relu(x))
    assert jnp.allclose(out2, general_relu_ref(x), atol=1e-6, rtol=1e-6)

    # Ragged path: flat length not a multiple of 128 exercises pad + masked tail.
    key2 = jax.random.PRNGKey(1)
    xr = jax.random.normal(key2, (3, 5, 7, 9), dtype=jnp.float32) * 3.0
    out3 = jax.block_until_ready(general_relu(xr, leak=leak, sub=sub, maxv=maxv))
    assert jnp.allclose(out3, general_relu_ref(xr, leak=leak, sub=sub, maxv=maxv),
                        atol=1e-6, rtol=1e-6)

    print("KERNEL_OK")
</pallas_src>

<mosaic_0001>
module attributes {stable_mosaic.version = 11 : i64} {
  func.func @_general_relu_kernel(%arg0: i32, %arg1: memref<8x128xf32, #tpu.memory_space<vmem>>, %arg2: memref<8x128xf32, #tpu.memory_space<vmem>>) attributes {dimension_semantics = [#tpu.dimension_semantics<parallel>], iteration_bounds = array<i64: 2>, scalar_prefetch = 0 : i64, scratch_operands = 0 : i64, tpu.core_type = #tpu.core_type<tc>, window_params = [{transform_indices = @transform_0, window_bounds = array<i64: 8, 128>}, {transform_indices = @transform_1, window_bounds = array<i64: 8, 128>}]} {
    %c0 = arith.constant 0 : index
    %c0_0 = arith.constant 0 : index
    %0 = vector.load %arg1[%c0, %c0_0] : memref<8x128xf32, #tpu.memory_space<vmem>>, vector<8x128xf32>
    %cst = arith.constant 0.000000e+00 : f32
    %1 = vector.broadcast %cst : f32 to vector<8x128xf32>
    %2 = arith.cmpf oge, %0, %1 : vector<8x128xf32>
    %cst_1 = arith.constant 1.000000e-01 : f32
    %3 = vector.broadcast %cst_1 : f32 to vector<8x128xf32>
    %4 = arith.mulf %0, %3 : vector<8x128xf32>
    %5 = arith.select %2, %0, %4 : vector<8x128xi1>, vector<8x128xf32>
    %cst_2 = arith.constant 4.000000e-01 : f32
    %6 = vector.broadcast %cst_2 : f32 to vector<8x128xf32>
    %7 = arith.subf %5, %6 : vector<8x128xf32>
    %cst_3 = arith.constant 6.000000e+00 : f32
    %8 = vector.broadcast %cst_3 : f32 to vector<8x128xf32>
    %9 = arith.minimumf %7, %8 : vector<8x128xf32>
    %c0_4 = arith.constant 0 : index
    %c0_5 = arith.constant 0 : index
    %10 = vector.load %arg2[%c0_4, %c0_5] : memref<8x128xf32, #tpu.memory_space<vmem>>, vector<8x128xf32>
    tpu.vector_store %arg2[%c0_4, %c0_5], %9 {strides = array<i32>} : memref<8x128xf32, #tpu.memory_space<vmem>>, vector<8x128xf32>,
    return
  }
  func.func @transform_0(%arg0: i32) -> (i32, i32) {
    %c0_i32 = arith.constant 0 : i32
    %c0_i32_0 = arith.constant 0 : i32
    return %arg0, %c0_i32 : i32, i32
  }
  func.func @transform_1(%arg0: i32) -> (i32, i32) {
    %c0_i32 = arith.constant 0 : i32
    %c0_i32_0 = arith.constant 0 : i32
    return %arg0, %c0_i32 : i32, i32
  }
}

</mosaic_0001>

<llo_original>
// kernel: tpu_custom_call.1
$region0: #{tpu_custom_call.1}
  #allocation0 [shape = 'u32[]', space=smem, size = 0x4, offset = 0x4, fixed_abs, tag = 'smem constant byte address 0x4 - core index']
  #allocation1 [shape = 'u32[72,128]{1,0:T(1,128)}', space=vmem, size = 0x9000, scoped, tag = 'internal scratch']
  %s0 = inlined_call_operand.hbm [shape: f32[16,128], index: 0, kind: input, shape index: {}]
  %s1 = inlined_call_operand.hbm [shape: f32[16,128], index: 1, kind: output, shape index: {}]
  %s2 = sld [smem:[#allocation0]]
  $region41: #{tpu_custom_call.1} parent=0
    _
  %s4 = ssub.s32 1, %s2
  %s5 = scalar_select 0, %s4, %s2
  $region1: #{tpu_custom_call.1} parent=0
    #allocation2 [shape = 'u8[8192]{0}', space=vmem, size = 0x2000, scoped, tag = 'input window, operand 0']
    #allocation3 [shape = 's32[2]{0}', space=sflag, size = 0x8, scoped, tag = 'scoped memory for tpu_custom_call.1']
    #allocation4 [shape = 's32[2]{0}', space=sflag, size = 0x8, scoped, tag = 'scoped memory for tpu_custom_call.1']
    #allocation5 [shape = 'u8[8192]{0}', space=vmem, size = 0x2000, scoped, tag = 'output window, operand 0']
    %6 = vsyncpa [#allocation3], 0
    %s7 = scalar_lea.sflag [#allocation3], 1
    %8 = vsyncpa %s7, 0
    %9 = vsyncpa [#allocation4], 0
    %s10 = scalar_lea.sflag [#allocation4], 1
    %11 = vsyncpa %s10, 0
    loop: start=0, step=1, limit=4
    $region2: #{tpu_custom_call.1} parent=1 // loop_pre_header
      _
    $region3: #{tpu_custom_call.1} parent=1 // loop_header
      %s13 = sphi 0, %s17
      %p14 = scmp.ge.s32.totalorder %s13, 4
      %s23 = sphi 0, %s25
      %s26 = sphi 0, %s23
      %s27 = sphi 0, %s26
      %s43 = sphi 0, %s27
      %s49 = sphi 0, %s51
      %s52 = sphi 0, %s49
      %s53 = sphi 0, %s52
      %s69 = sphi 0, %s53
    $region4: #{tpu_custom_call.1} parent=1 // loop_header_branch
      %16 = sbr.rel (%p14) target = $region8
    $region5: #{tpu_custom_call.1} parent=1 // loop_body
      %s18 = ssub.s32 %s13, 1
      %s19 = ssub.s32 %s13, 2
      %s20 = sadd.s32 %s13, 1
      %s21 = ssub.s32 %s13, %s20
      %p22 = scmp.eq.s32.totalorder %s21, 0
      %s24 = sadd.s32 %s23, 1
      %s25 = scalar_select %p22, %s23, %s24
      %p28 = pneg %p22
      %p29 = scmp.eq.s32.totalorder %s13, 1
      %p30 = por %p28, %p29
      %p31 = scmp.ne.s32.totalorder %s23, %s26
      %p32 = scmp.eq.s32.totalorder %s13, 0
      %p33 = por %p31, %p32
      %p34 = scmp.ne.s32.totalorder %s23, %s26
      %p35 = scmp.eq.s32.totalorder %s18, 1
      %p36 = por %p34, %p35
      %p37 = scmp.ne.s32.totalorder %s26, %s27
      %p38 = scmp.eq.s32.totalorder %s18, 0
      %p39 = por %p37, %p38
      %p40 = scmp.ne.s32.totalorder %s26, %s27
      %p41 = scmp.eq.s32.totalorder %s19, 1
      %p42 = por %p40, %p41
      %p44 = scmp.ne.s32.totalorder %s27, %s43
      %p45 = scmp.eq.s32.totalorder %s19, 0
      %p46 = por %p44, %p45
      %s47 = ssub.s32 %s13, %s20
      %p48 = scmp.eq.s32.totalorder %s47, 0
      %s50 = sadd.s32 %s49, 1
      %s51 = scalar_select %p48, %s49, %s50
      %p54 = pneg %p48
      %p55 = scmp.eq.s32.totalorder %s13, 1
      %p56 = por %p54, %p55
      %p57 = scmp.ne.s32.totalorder %s49, %s52
      %p58 = scmp.eq.s32.totalorder %s13, 0
      %p59 = por %p57, %p58
      %p60 = scmp.ne.s32.totalorder %s49, %s52
      %p61 = scmp.eq.s32.totalorder %s18, 1
      %p62 = por %p60, %p61
      %p63 = scmp.ne.s32.totalorder %s52, %s53
      %p64 = scmp.eq.s32.totalorder %s18, 0
      %p65 = por %p63, %p64
      %p66 = scmp.ne.s32.totalorder %s52, %s53
      %p67 = scmp.eq.s32.totalorder %s19, 1
      %p68 = por %p66, %p67
      %p70 = scmp.ne.s32.totalorder %s53, %s69
      %p71 = scmp.eq.s32.totalorder %s19, 0
      %p72 = por %p70, %p71
      %p73 = scmp.le.s32.totalorder 1, %s13
      %p74 = scmp.lt.s32.totalorder %s13, 3
      %p75 = pnand %p73, %p74
      %p76 = pneg %p75
      // Predicated region
      $region9: #{tpu_custom_call.1} parent=5 // pred_check
        _
      $region10: #{tpu_custom_call.1} parent=5 // pred_check_branch
        %78 = sbr.rel (%p75) target = $region12
      $region11: #{tpu_custom_call.1} parent=5 // pred_region
        %s79 = ssub.s32 %s13, 1
      $region12: #{tpu_custom_call.1} parent=5 // pred_fallthru
        _
      %p80 = scmp.lt.s32.totalorder %s13, 2
      // Predicated region
      $region13: #{tpu_custom_call.1} parent=5 // pred_check
        %p81 = pneg %p80
      $region14: #{tpu_custom_call.1} parent=5 // pred_check_branch
        %83 = sbr.rel (%p81) target = $region16
      $region15: #{tpu_custom_call.1} parent=5 // pred_region
        // Predicated region
        $region17: #{tpu_custom_call.1} parent=15 // pred_check
          %p84 = pneg %p33
        $region18: #{tpu_custom_call.1} parent=15 // pred_check_branch
          %86 = sbr.rel (%p84) target = $region20
        $region19: #{tpu_custom_call.1} parent=15 // pred_region
          %s87 = sand.u32 %s23, 1
          %s88 = scalar_lea.sflag [#allocation3], %s87
          %s89 = sand.u32 %s23, 1
          %s90 = smul.addr %s89, 8
          %s91 = scalar_lea.vmem [#allocation2], %s90
          %93 = vsyncadd %s88, 0
          %s94 = smul.addr %s13, 8
          %s95 = scalar_lea.hbm %s0, %s94
          %s97 = sshll.u32 %s95, 4
          %s98 = int_to_ptr.hbm [resolvable:$true] %s97
          %s99 = sshll.u32 %s91, 4
          %s100 = int_to_ptr.vmem [resolvable:$true] %s99
          %102 = dma.hbm_to_vmem [thread:$0]  %s98, 128, %s100, %s88
        $region20: #{tpu_custom_call.1} parent=15 // pred_fallthru
          _
      $region16: #{tpu_custom_call.1} parent=5 // pred_fallthru
        _
      %p103 = scmp.le.s32.totalorder 1, %s13
      %p104 = scmp.lt.s32.totalorder %s13, 3
      %p105 = pnand %p103, %p104
      %p106 = pneg %p105
      // Predicated region
      $region21: #{tpu_custom_call.1} parent=5 // pred_check
        _
      $region22: #{tpu_custom_call.1} parent=5 // pred_check_branch
        %108 = sbr.rel (%p105) target = $region24
      $region23: #{tpu_custom_call.1} parent=5 // pred_region
        %s109 = ssub.s32 %s13, 1
        %s110 = sand.u32 %s26, 1
        %s111 = scalar_lea.sflag [#allocation3], %s110
        %s112 = sand.u32 %s26, 1
        %s113 = smul.addr %s112, 8
        %s114 = scalar_lea.vmem [#allocation2], %s113
        // Predicated region
        $region25: #{tpu_custom_call.1} parent=23 // pred_check
          %p115 = pneg %p39
        $region26: #{tpu_custom_call.1} parent=23 // pred_check_branch
          %117 = sbr.rel (%p115) target = $region28
        $region27: #{tpu_custom_call.1} parent=23 // pred_region
          %119 = dma.done %s111, 128
        $region28: #{tpu_custom_call.1} parent=23 // pred_fallthru
          _
        %s120 = sand.u32 %s26, 1
        %s121 = scalar_lea.sflag [#allocation3], %s120
        %s122 = sand.u32 %s26, 1
        %s123 = smul.addr %s122, 8
        %s124 = scalar_lea.vmem [#allocation2], %s123
        %p125 = pneg %p39
        %p126 = pneg %p36
        %p127 = pneg %p65
        %p128 = pneg %p62
        %s129 = sand.u32 %s52, 1
        %s130 = scalar_lea.sflag [#allocation4], %s129
        %s131 = sand.u32 %s52, 1
        %s132 = smul.addr %s131, 8
        %s133 = scalar_lea.vmem [#allocation5], %s132
        %v134 = vld [vmem:[%s114] sm:$0xff]
        %vm135 = vcmp.ge.f32.partialorder %v134, 0.0
        %v136 = vmul.f32 %v134, 0.1
        %v137 = vsel %vm135, %v134, %v136
        %v138 = vsub.f32 %v137, 0.4
        %v139 = vmin.f32 %v138, 6.0
        %140 = vst [vmem:[%s133] sm:$0xff] %v139
        %s141 = sand.u32 %s52, 1
        %s142 = scalar_lea.sflag [#allocation4], %s141
        %s143 = sand.u32 %s52, 1
        %s144 = smul.addr %s143, 8
        %s145 = scalar_lea.vmem [#allocation5], %s144
        // Predicated region
        $region29: #{tpu_custom_call.1} parent=23 // pred_check
          %p146 = pneg %p62
        $region30: #{tpu_custom_call.1} parent=23 // pred_check_branch
          %148 = sbr.rel (%p146) target = $region32
        $region31: #{tpu_custom_call.1} parent=23 // pred_region
          %150 = vsyncadd %s142, 0
          %s151 = smul.addr %s18, 8
          %s152 = scalar_lea.hbm %s1, %s151
          %s154 = sshll.u32 %s145, 4
          %s155 = int_to_ptr.vmem [resolvable:$true] %s154
          %s156 = sshll.u32 %s152, 4
          %s157 = int_to_ptr.hbm [resolvable:$true] %s156
          %159 = dma.vmem_to_hbm [thread:$0]  %s155, 128, %s157, %s142
        $region32: #{tpu_custom_call.1} parent=23 // pred_fallthru
          _
      $region24: #{tpu_custom_call.1} parent=5 // pred_fallthru
        _
      %p160 = scmp.le.s32.totalorder 2, %s13
      // Predicated region
      $region33: #{tpu_custom_call.1} parent=5 // pred_check
        %p161 = pneg %p160
      $region34: #{tpu_custom_call.1} parent=5 // pred_check_branch
        %163 = sbr.rel (%p161) target = $region36
      $region35: #{tpu_custom_call.1} parent=5 // pred_region
        %s164 = ssub.s32 %s13, 2
        // Predicated region
        $region37: #{tpu_custom_call.1} parent=35 // pred_check
          %p165 = pneg %p68
        $region38: #{tpu_custom_call.1} parent=35 // pred_check_branch
          %167 = sbr.rel (%p165) target = $region40
        $region39: #{tpu_custom_call.1} parent=35 // pred_region
          %s168 = sand.u32 %s53, 1
          %s169 = scalar_lea.sflag [#allocation4], %s168
          %s170 = sand.u32 %s53, 1
          %s171 = smul.addr %s170, 8
          %s172 = scalar_lea.vmem [#allocation5], %s171
          %174 = dma.done %s169, 128
        $region40: #{tpu_custom_call.1} parent=35 // pred_fallthru
          _
      $region36: #{tpu_custom_call.1} parent=5 // pred_fallthru
        _
    $region6: #{tpu_custom_call.1} parent=1 // loop_footer
      %s17 = sadd.s32 1, %s13
    $region7: #{tpu_custom_call.1} parent=1 // loop_footer_branch
      %12 = sbr.rel target = $region3
    $region8: #{tpu_custom_call.1} parent=1 // loop_exit
      _
    %175 = vsyncpa [#allocation3], 1
    %s176 = scalar_lea.sflag [#allocation3], 1
    %177 = vsyncpa %s176, 1
    %178 = vsyncpa [#allocation4], 1
    %s179 = scalar_lea.sflag [#allocation4], 1
    %180 = vsyncpa %s179, 1

</llo_original>
